<compile_context>
chip_gen: v7x
topology: tpu7x:2x2x1
jax: 0.10.0
libtpu: 0.0.40
codegen_flags: <defaults>
</compile_context>

<pallas_src>
import functools
import math

import jax
import jax.numpy as jnp
from jax.experimental import pallas as pl
from jax.experimental.pallas import tpu as pltpu


def _pick_tile(n, max_tile):
    """Largest divisor of n that is <= max_tile."""
    t = max(1, min(n, max_tile))
    while n % t:
        t -= 1
    return t


# ----------------------------- Pallas kernels ------------------------------

def matmul_bias_kernel(x_ref, w_ref, b_ref, o_ref):
    """out = x @ w + b (row-tiled, lane-dense output)."""
    o_ref[...] = (
        jnp.dot(x_ref[...], w_ref[...], preferred_element_type=jnp.float32)
        + b_ref[...]
    ).astype(o_ref.dtype)


def _lstm_cell_chunk(gx_ref, whh_ref, h_scr, c_scr, emit):
    """Run TILE_T LSTM steps on the current chunk; call emit(s, h_new)."""
    tile_t = gx_ref.shape[0]
    H = h_scr.shape[-1]

    def step(s, carry):
        # Only the h-dependent matmul sits on the serial critical path.
        gates = gx_ref[s] + jnp.dot(
            h_scr[...], whh_ref[...], preferred_element_type=jnp.float32)
        # At production sizes keep H a multiple of 128 so these slices are
        # lane-tile aligned (pure VPU/EUP work, no masked extracts).
        i_g = jax.nn.sigmoid(gates[:, 0 * H:1 * H])
        f_g = jax.nn.sigmoid(gates[:, 1 * H:2 * H])
        g_g = jnp.tanh(gates[:, 2 * H:3 * H])
        o_g = jax.nn.sigmoid(gates[:, 3 * H:4 * H])

        c_new = f_g * c_scr[...] + i_g * g_g
        h_new = o_g * jnp.tanh(c_new)

        c_scr[...] = c_new
        h_scr[...] = h_new
        emit(s, h_new)
        return carry

    # Short fixed trip-count: unroll so the LLO scheduler sees the whole chunk.
    jax.lax.fori_loop(0, tile_t, step, 0, unroll=True)


def lstm_recurrence_kernel(gx_ref, whh_ref, out_ref, h_scr, c_scr):
    """LSTM recurrence over one chunk of TILE_T timesteps, emitting every h.

    gx_ref:  (TILE_T, B, 4H) precomputed x@W_ih^T + bias (time-major chunk)
    whh_ref: (H, 4H)         W_hh transposed (grid-invariant)
    out_ref: (TILE_T, B, H)  hidden outputs for this chunk
    h_scr/c_scr: (B, H)      recurrent state, persistent across grid steps
    """
    t = pl.program_id(0)

    @pl.when(t == 0)
    def _():
        h_scr[...] = jnp.zeros_like(h_scr)
        c_scr[...] = jnp.zeros_like(c_scr)

    def emit(s, h_new):
        out_ref[s] = h_new.astype(out_ref.dtype)

    _lstm_cell_chunk(gx_ref, whh_ref, h_scr, c_scr, emit)


def lstm_recurrence_last_kernel(gx_ref, whh_ref, out_ref, h_scr, c_scr):
    """Same recurrence, but only the final hidden state is produced.

    out_ref: (B, H), grid-resident (constant block index across the time
    axis), so HBM writeback happens once at the end of the grid.
    """
    t = pl.program_id(0)

    @pl.when(t == 0)
    def _():
        h_scr[...] = jnp.zeros_like(h_scr)
        c_scr[...] = jnp.zeros_like(c_scr)

    _lstm_cell_chunk(gx_ref, whh_ref, h_scr, c_scr, lambda s, h: None)

    # Cheap VMEM store; written back to HBM only after the last grid step.
    out_ref[...] = h_scr[...].astype(out_ref.dtype)


# ------------------------------ Wrappers ------------------------------------

def matmul_bias_pallas(x, w, b, *, max_row_tile=256):
    """out = x @ w + b, tiled along rows. Used for the hoisted input
    projection (rows = T*B) and the final FC (rows = B)."""
    R, K = x.shape
    N = w.shape[1]
    tr = _pick_tile(R, max_row_tile)
    return pl.pallas_call(
        matmul_bias_kernel,
        out_shape=jax.ShapeDtypeStruct((R, N), jnp.float32),
        grid=(R // tr,),
        in_specs=[
            pl.BlockSpec((tr, K), lambda r: (r, 0)),
            pl.BlockSpec((K, N), lambda r: (0, 0)),
            pl.BlockSpec((1, N), lambda r: (0, 0)),
        ],
        out_specs=pl.BlockSpec((tr, N), lambda r: (r, 0)),
        compiler_params=pltpu.CompilerParams(
            dimension_semantics=("parallel",)),
    )(x, w, b)


def lstm_recurrence_pallas(gx, whh_T, hidden_size, *, return_all,
                           max_tile_t=32):
    """Run the LSTM recurrence over time-major precomputed gates gx.

    return_all=True  -> (T, B, H) full hidden sequence (needed as the next
                        layer's input).
    return_all=False -> (B, H) final hidden state only (last layer: the
                        module only consumes out[:, -1, :]).
    """
    T, B, G = gx.shape
    H = hidden_size
    tile_t = _pick_tile(T, max_tile_t)

    if return_all:
        kernel = lstm_recurrence_kernel
        out_shape = jax.ShapeDtypeStruct((T, B, H), jnp.float32)
        out_specs = pl.BlockSpec((tile_t, B, H), lambda t: (t, 0, 0))
    else:
        kernel = lstm_recurrence_last_kernel
        out_shape = jax.ShapeDtypeStruct((B, H), jnp.float32)
        out_specs = pl.BlockSpec((B, H), lambda t: (0, 0))

    return pl.pallas_call(
        kernel,
        out_shape=out_shape,
        grid_spec=pltpu.PrefetchScalarGridSpec(
            num_scalar_prefetch=0,
            grid=(T // tile_t,),
            in_specs=[
                pl.BlockSpec((tile_t, B, G), lambda t: (t, 0, 0)),
                pl.BlockSpec((H, G), lambda t: (0, 0)),
            ],
            out_specs=out_specs,
            scratch_shapes=[
                pltpu.VMEM((B, H), jnp.float32),  # h state
                pltpu.VMEM((B, H), jnp.float32),  # c state
            ],
        ),
        # Time axis is strictly sequential: h/c scratch carries state across
        # grid steps, so this axis must stay "arbitrary".
        compiler_params=pltpu.CompilerParams(
            dimension_semantics=("arbitrary",)),
    )(gx, whh_T)


def lstm_forward(x, layer_params, fc_wT, fc_b, num_features, hidden_size):
    """Mirrors LSTM.forward: reshape -> stacked LSTM -> fc(out[:, -1, :])."""
    B = x.shape[0]
    x = x.reshape(B, -1, num_features)            # (B, T, F), as in the module
    T = x.shape[1]
    # Single transpose of the (smallest) tensor to time-major; every later
    # activation is produced time-major, so no further transposes are needed.
    seq = jnp.transpose(x, (1, 0, 2))             # (T, B, F)
    num_layers = len(layer_params)
    h_last = None
    for layer, (wih_T, whh_T, bias) in enumerate(layer_params):
        F_in = seq.shape[-1]
        # Hoisted projection: one big (T*B, F) x (F, 4H) MXU matmul (+ bias).
        gx = matmul_bias_pallas(seq.reshape(T * B, F_in), wih_T, bias)
        gx = gx.reshape(T, B, -1)                 # (T, B, 4H), time-major
        is_last = layer == num_layers - 1
        out = lstm_recurrence_pallas(
            gx, whh_T, hidden_size, return_all=not is_last)
        if is_last:
            h_last = out                          # (B, H) == out[:, -1, :]
        else:
            seq = out                             # (T, B, H)
    return matmul_bias_pallas(h_last, fc_wT, fc_b)


# -------------------------- Pure-JAX reference ------------------------------

def lstm_ref(x, layer_params, fc_wT, fc_b, num_features, hidden):
    B = x.shape[0]
    seq = x.reshape(B, -1, num_features)
    for (wih_T, whh_T, bias) in layer_params:
        def step(carry, x_t):
            h, c = carry
            gates = x_t @ wih_T + h @ whh_T + bias
            i = jax.nn.sigmoid(gates[:, :hidden])
            f = jax.nn.sigmoid(gates[:, hidden:2 * hidden])
            g = jnp.tanh(gates[:, 2 * hidden:3 * hidden])
            o = jax.nn.sigmoid(gates[:, 3 * hidden:])
            c = f * c + i * g
            h = o * jnp.tanh(c)
            return (h, c), h
        h0 = jnp.zeros((B, hidden), jnp.float32)
        c0 = jnp.zeros((B, hidden), jnp.float32)
        _, hs = jax.lax.scan(step, (h0, c0), jnp.transpose(seq, (1, 0, 2)))
        seq = jnp.transpose(hs, (1, 0, 2))
    return seq[:, -1, :] @ fc_wT + fc_b


# --------------------------------- Main --------------------------------------

if __name__ == "__main__":
    # Small shapes consistent with the module's forward.
    B, T = 2, 16
    input_size, hidden_size, num_layers, num_classes = 16, 32, 2, 10

    key = jax.random.PRNGKey(0)
    k_x, key = jax.random.split(key)
    x = jax.random.normal(k_x, (B, T, input_size), dtype=jnp.float32)

    # Deterministic parameter init (PyTorch-style uniform(-1/sqrt(H), 1/sqrt(H))).
    bound = 1.0 / math.sqrt(hidden_size)
    layer_params = []
    for layer in range(num_layers):
        in_dim = input_size if layer == 0 else hidden_size
        k1, k2, k3, k4, key = jax.random.split(key, 5)
        w_ih = jax.random.uniform(k1, (4 * hidden_size, in_dim),
                                  minval=-bound, maxval=bound, dtype=jnp.float32)
        w_hh = jax.random.uniform(k2, (4 * hidden_size, hidden_size),
                                  minval=-bound, maxval=bound, dtype=jnp.float32)
        b_ih = jax.random.uniform(k3, (4 * hidden_size,),
                                  minval=-bound, maxval=bound, dtype=jnp.float32)
        b_hh = jax.random.uniform(k4, (4 * hidden_size,),
                                  minval=-bound, maxval=bound, dtype=jnp.float32)
        layer_params.append(
            (w_ih.T, w_hh.T, (b_ih + b_hh).reshape(1, 4 * hidden_size)))

    k5, k6, key = jax.random.split(key, 3)
    fc_bound = 1.0 / math.sqrt(hidden_size)
    fc_w = jax.random.uniform(k5, (num_classes, hidden_size),
                              minval=-fc_bound, maxval=fc_bound, dtype=jnp.float32)
    fc_b = jax.random.uniform(k6, (num_classes,),
                              minval=-fc_bound, maxval=fc_bound, dtype=jnp.float32)
    fc_wT = fc_w.T
    fc_b2d = fc_b.reshape(1, num_classes)

    out = lstm_forward(x, layer_params, fc_wT, fc_b2d, input_size, hidden_size)
    out = jax.block_until_ready(out)
    assert out.shape == (B, num_classes)

    ref = lstm_ref(x, layer_params, fc_wT, fc_b2d, input_size, hidden_size)
    assert jnp.allclose(out, ref, atol=1e-4, rtol=1e-4), "mismatch vs reference"

    print("KERNEL_OK")
</pallas_src>

<mosaic_0001>
module attributes {stable_mosaic.version = 11 : i64} {
  func.func @matmul_bias_kernel(%arg0: i32, %arg1: memref<32x16xf32, #tpu.memory_space<vmem>>, %arg2: memref<16x128xf32, #tpu.memory_space<vmem>>, %arg3: memref<1x128xf32, #tpu.memory_space<vmem>>, %arg4: memref<32x128xf32, #tpu.memory_space<vmem>>) attributes {dimension_semantics = [#tpu.dimension_semantics<parallel>], iteration_bounds = array<i64: 1>, scalar_prefetch = 0 : i64, scratch_operands = 0 : i64, tpu.core_type = #tpu.core_type<tc>, window_params = [{transform_indices = @transform_0, window_bounds = array<i64: 32, 16>}, {pipeline_mode = #tpu.pipeline_mode<synchronous>, transform_indices = @transform_1, window_bounds = array<i64: 16, 128>}, {pipeline_mode = #tpu.pipeline_mode<synchronous>, transform_indices = @transform_2, window_bounds = array<i64: 1, 128>}, {transform_indices = @transform_3, window_bounds = array<i64: 32, 128>}]} {
    %c0 = arith.constant 0 : index
    %c0_0 = arith.constant 0 : index
    %0 = vector.load %arg1[%c0, %c0_0] : memref<32x16xf32, #tpu.memory_space<vmem>>, vector<32x16xf32>
    %c0_1 = arith.constant 0 : index
    %c0_2 = arith.constant 0 : index
    %1 = vector.load %arg2[%c0_1, %c0_2] : memref<16x128xf32, #tpu.memory_space<vmem>>, vector<16x128xf32>
    %cst = arith.constant dense<0.000000e+00> : vector<32x128xf32>
    %2 = tpu.matmul %0, %1, %cst {dimension_numbers = #tpu.dot_dimension_numbers<[1], [0], [0], [1], [0, 0, 1, 1], [], []>} : vector<32x16xf32>, vector<16x128xf32>, vector<32x128xf32> -> vector<32x128xf32>
    %c0_3 = arith.constant 0 : index
    %c0_4 = arith.constant 0 : index
    %3 = vector.load %arg3[%c0_3, %c0_4] : memref<1x128xf32, #tpu.memory_space<vmem>>, vector<1x128xf32>
    %4 = vector.broadcast %3 : vector<1x128xf32> to vector<32x128xf32>
    %5 = arith.addf %2, %4 : vector<32x128xf32>
    %c0_5 = arith.constant 0 : index
    %c0_6 = arith.constant 0 : index
    %6 = vector.load %arg4[%c0_5, %c0_6] : memref<32x128xf32, #tpu.memory_space<vmem>>, vector<32x128xf32>
    tpu.vector_store %arg4[%c0_5, %c0_6], %5 {strides = array<i32>} : memref<32x128xf32, #tpu.memory_space<vmem>>, vector<32x128xf32>,
    return
  }
  func.func @transform_0(%arg0: i32) -> (i32, i32) {
    %c0_i32 = arith.constant 0 : i32
    %c0_i32_0 = arith.constant 0 : i32
    return %arg0, %c0_i32 : i32, i32
  }
  func.func @transform_1(%arg0: i32) -> (i32, i32) {
    %c0_i32 = arith.constant 0 : i32
    %c0_i32_0 = arith.constant 0 : i32
    %c0_i32_1 = arith.constant 0 : i32
    return %c0_i32, %c0_i32_0 : i32, i32
  }
  func.func @transform_2(%arg0: i32) -> (i32, i32) {
    %c0_i32 = arith.constant 0 : i32
    %c0_i32_0 = arith.constant 0 : i32
    %c0_i32_1 = arith.constant 0 : i32
    return %c0_i32, %c0_i32_0 : i32, i32
  }
  func.func @transform_3(%arg0: i32) -> (i32, i32) {
    %c0_i32 = arith.constant 0 : i32
    %c0_i32_0 = arith.constant 0 : i32
    return %arg0, %c0_i32 : i32, i32
  }
}

</mosaic_0001>

<llo_original>
// kernel: tpu_custom_call.1
$region0: #{tpu_custom_call.1}
  #allocation0 [shape = 'u32[]', space=smem, size = 0x4, offset = 0x4, fixed_abs, tag = 'smem constant byte address 0x4 - core index']
  #allocation1 [shape = 'u32[144,128]{1,0:T(1,128)}', space=vmem, size = 0x12000, scoped, tag = 'internal scratch']
  %s0 = inlined_call_operand.vmem [shape: f32[32,16], index: 0, kind: input, shape index: {}]
  %s1 = inlined_call_operand.vmem [shape: f32[16,128], index: 1, kind: input, shape index: {}]
  %s2 = inlined_call_operand.vmem [shape: f32[1,128], index: 2, kind: input, shape index: {}]
  %s3 = inlined_call_operand.hbm [shape: f32[32,128], index: 3, kind: output, shape index: {}]
  %s4 = sld [smem:[#allocation0]]
  $region22: #{tpu_custom_call.1} parent=0
    _
  %s6 = ssub.s32 1, %s4
  %s7 = scalar_select 0, %s6, %s4
  $region1: #{tpu_custom_call.1} parent=0
    #allocation2 [shape = 'u8[16384]{0}', space=vmem, size = 0x4000, scoped, tag = 'output window, operand 0, single buffered']
    #allocation3 [shape = 's32[1]{0}', space=sflag, size = 0x4, scoped, tag = 'scoped memory for tpu_custom_call.1']
    %8 = vsyncpa [#allocation3], 0
    // Predicated region
    $region2: #{tpu_custom_call.1} parent=1 // pred_check
      _
    $region3: #{tpu_custom_call.1} parent=1 // pred_check_branch
      %10 = sbr.rel (0) target = $region5
    $region4: #{tpu_custom_call.1} parent=1 // pred_region
      _
    $region5: #{tpu_custom_call.1} parent=1 // pred_fallthru
      _
    // Predicated region
    $region6: #{tpu_custom_call.1} parent=1 // pred_check
      _
    $region7: #{tpu_custom_call.1} parent=1 // pred_check_branch
      %12 = sbr.rel (0) target = $region9
    $region8: #{tpu_custom_call.1} parent=1 // pred_region
      _
    $region9: #{tpu_custom_call.1} parent=1 // pred_fallthru
      _
    // Predicated region
    $region10: #{tpu_custom_call.1} parent=1 // pred_check
      _
    $region11: #{tpu_custom_call.1} parent=1 // pred_check_branch
      %14 = sbr.rel (0) target = $region13
    $region12: #{tpu_custom_call.1} parent=1 // pred_region
      _
    $region13: #{tpu_custom_call.1} parent=1 // pred_fallthru
      _
    %v15 = vld [vmem:[%s0] sm:$0xff]
    %v16 = vld [vmem:[%s0 + $0x8] sm:$0xff]
    %v17 = vld [vmem:[%s0 + $0x10] sm:$0xff]
    %v18 = vld [vmem:[%s0 + $0x18] sm:$0xff]
    %v19 = vld [vmem:[%s1] sm:$0xff]
    %v20 = vld [vmem:[%s1 + $0x8] sm:$0xff]
    %v21 = vld [vmem:[%s2] sm:$0x1]
    %v23 = vlaneseq
    %v24 = vshrl.u32 %v23, 7
    %v25 = vsub.s32 0, %v24
    %v26 = vrot.slane %v21, %v25
    %vm28 = vcmask 130048
    %v30 = vsel %vm28, %v15, 0
    %v33 = vsel %vm28, %v16, 0
    %v36 = vsel %vm28, %v17, 0
    %v39 = vsel %vm28, %v18, 0
    %41 = vmatprep.subr.mxu0 0.0
    %42 = vmatpush1.msra.mxu0 %v19
    %43 = vmatprep.subr.mxu0 0.0
    %44 = vmatpush1.msra.mxu0 %v20
    %45 = vmatprep.subr.mxu0 0.0
    %46 = vmatpush1.msra.mxu0 0.0
    %47 = vmatprep.subr.mxu0 0.0
    %48 = vmatpush1.msra.mxu0 0.0
    %49 = vmatprep.subr.mxu0 0.0
    %50 = vmatpush1.msra.mxu0 0.0
    %51 = vmatprep.subr.mxu0 0.0
    %52 = vmatpush1.msra.mxu0 0.0
    %53 = vmatprep.subr.mxu0 0.0
    %54 = vmatpush1.msra.mxu0 0.0
    %55 = vmatprep.subr.mxu0 0.0
    %56 = vmatpush1.msra.mxu0 0.0
    %57 = vmatprep.subr.mxu0 0.0
    %58 = vmatpush1.msra.mxu0 0.0
    %59 = vmatprep.subr.mxu0 0.0
    %60 = vmatpush1.msra.mxu0 0.0
    %61 = vmatprep.subr.mxu0 0.0
    %62 = vmatpush1.msra.mxu0 0.0
    %63 = vmatprep.subr.mxu0 0.0
    %64 = vmatpush1.msra.mxu0 0.0
    %65 = vmatprep.subr.mxu0 0.0
    %66 = vmatpush1.msra.mxu0 0.0
    %67 = vmatprep.subr.mxu0 0.0
    %68 = vmatpush1.msra.mxu0 0.0
    %69 = vmatprep.subr.mxu0 0.0
    %70 = vmatpush1.msra.mxu0 0.0
    %71 = vmatprep.subr.mxu0 0.0
    %72 = vmatpush1.msra.mxu0 0.0
    %73 = vmatprep.subr.mxu0 0.0
    %74 = vmatpush1.msra.mxu0 0.0
    %75 = vmatprep.subr.mxu0 0.0
    %76 = vmatpush1.msra.mxu0 0.0
    %77 = vmatprep.subr.mxu0 0.0
    %78 = vmatpush1.msra.mxu0 0.0
    %79 = vmatprep.subr.mxu0 0.0
    %80 = vmatpush1.msra.mxu0 0.0
    %81 = vmatprep.subr.mxu0 0.0
    %82 = vmatpush1.msra.mxu0 0.0
    %83 = vmatprep.subr.mxu0 0.0
    %84 = vmatpush1.msra.mxu0 0.0
    %85 = vmatprep.subr.mxu0 0.0
    %86 = vmatpush1.msra.mxu0 0.0
    %87 = vmatprep.subr.mxu0 0.0
    %88 = vmatpush1.msra.mxu0 0.0
    %89 = vmatprep.subr.mxu0 0.0
    %90 = vmatpush1.msra.mxu0 0.0
    %91 = vmatprep.subr.mxu0 0.0
    %92 = vmatpush1.msra.mxu0 0.0
    %93 = vmatprep.subr.mxu0 0.0
    %94 = vmatpush1.msra.mxu0 0.0
    %95 = vmatprep.subr.mxu0 0.0
    %96 = vmatpush1.msra.mxu0 0.0
    %97 = vmatprep.subr.mxu0 0.0
    %98 = vmatpush1.msra.mxu0 0.0
    %99 = vmatprep.subr.mxu0 0.0
    %100 = vmatpush1.msra.mxu0 0.0
    %101 = vmatprep.subr.mxu0 0.0
    %102 = vmatpush1.msra.mxu0 0.0
    %103 = vmatprep.subr.mxu0 0.0
    %104 = vmatpush1.msra.mxu0 0.0
    %105 = vmatprep.mubr.f32.mxu0 0.0
    %106 = vmatmul.mubr.f32.gmra.mrb[0].mxu0 %v30
    %v107 = vpop.f32.mrb[0].mxu0
    %v108 = vadd.f32 %v26, %v107
    %v109 = vpop.f32.mrb[0].mxu0
    %110 = vmatprep.mubr.f32.mxu0 0.0
    %111 = vmatmul.mubr.f32.gmra.mrb[0].mxu0 %v33
    %v112 = vpop.f32.mrb[0].mxu0
    %v113 = vadd.f32 %v26, %v112
    %v114 = vpop.f32.mrb[0].mxu0
    %115 = vmatprep.mubr.f32.mxu0 0.0
    %116 = vmatmul.mubr.f32.gmra.mrb[0].mxu0 %v36
    %v117 = vpop.f32.mrb[0].mxu0
    %v118 = vadd.f32 %v26, %v117
    %v119 = vpop.f32.mrb[0].mxu0
    %120 = vmatprep.mubr.f32.mxu0 0.0
    %121 = vmatmul.mubr.f32.gmra.mrb[0].mxu0 %v39
    %v122 = vpop.f32.mrb[0].mxu0
    %v123 = vadd.f32 %v26, %v122
    %v124 = vpop.f32.mrb[0].mxu0
    %125 = vdwg.mxu0
    %126 = vst [vmem:[#allocation2] sm:$0xff] %v108
    %127 = vst [vmem:[#allocation2 + $0x8] sm:$0xff] %v113
    %128 = vst [vmem:[#allocation2 + $0x10] sm:$0xff] %v118
    %129 = vst [vmem:[#allocation2 + $0x18] sm:$0xff] %v123
    // Predicated region
    $region14: #{tpu_custom_call.1} parent=1 // pred_check
      _
    $region15: #{tpu_custom_call.1} parent=1 // pred_check_branch
      %131 = sbr.rel (0) target = $region17
    $region16: #{tpu_custom_call.1} parent=1 // pred_region
      %s133 = ssub.s32 512, 512
      %134 = vsyncadd [#allocation3], %s133
      %s135 = sshll.u32 [#allocation2], 4
      %s136 = int_to_ptr.vmem [resolvable:$true] %s135
      %141 = dma.vmem_to_hbm [thread:$0]  %s136, 512, %s3, [#allocation3], 128, 128, 8
    $region17: #{tpu_custom_call.1} parent=1 // pred_fallthru
      _
    // Predicated region
    $region18: #{tpu_custom_call.1} parent=1 // pred_check
      _
    $region19: #{tpu_custom_call.1} parent=1 // pred_check_branch
      %143 = sbr.rel (0) target = $region21
    $region20: #{tpu_custom_call.1} parent=1 // pred_region
      %144 = dma.done [#allocation3], 512
    $region21: #{tpu_custom_call.1} parent=1 // pred_fallthru
      _
    %145 = vsyncpa [#allocation3], 1

</llo_original>
